<compile_context>
chip_gen: v7x
topology: tpu7x:2x2x1
jax: 0.10.0
libtpu: 0.0.40
codegen_flags: <defaults>
</compile_context>

<pallas_src>
import jax
import jax.numpy as jnp
import numpy as np
from jax.experimental import pallas as pl
from jax.experimental.pallas import tpu as pltpu


def _round_up(x, m):
    return m * pl.cdiv(x, m)


def hamilton_kernel(z_ref, w1t_ref, w1sw_ref, b1_ref, out_ref):
    # z    : (TM, 2dp)   batch tile (pipelined)
    # w1t  : (2dp, dp)   W1^T, lane-padded (VMEM resident, single-buffered)
    # w1sw : (dp, 2dp)   W1 with w2 and the output sign folded in (resident)
    # b1   : (1, dp)     f32 bias row (resident)
    z = z_ref[...]

    # Linear1 pre-activation: z @ W1^T + b1   -> (TM, dp)   (MXU, f32 accumulate)
    pre = jnp.dot(z, w1t_ref[...], preferred_element_type=jnp.float32)
    pre = pre + b1_ref[...]

    th = jnp.tanh(pre)               # EUP
    s = 1.0 - th * th                # VPU; w2 scaling is folded into w1sw

    # Chain rule back through Linear1; w2 and the [-dH/dx | dH/dv] sign flip are
    # pre-folded into w1sw, so this single MXU matmul directly produces the output.
    grad = jnp.dot(s.astype(w1sw_ref.dtype), w1sw_ref[...],
                   preferred_element_type=jnp.float32)
    out_ref[...] = grad.astype(out_ref.dtype)


def _resident_spec(shape):
    # Constant-index weights/bias: single-buffer them (double-buffering a block
    # whose index never changes is pure VMEM waste).  Fall back gracefully if
    # this jax build's BlockSpec has no pipeline_mode.
    try:
        return pl.BlockSpec(shape, lambda i: (0, 0), pipeline_mode=pl.Buffered(1))
    except (TypeError, AttributeError):
        return pl.BlockSpec(shape, lambda i: (0, 0))


def hamilton_forward(t, input_, w1, b1, w2, b2, *, block_rows=512,
                     use_bf16_matmul=False):
    """Pallas forward of Hamilton: returns hstack([-dH/dx, dH/dv])."""
    # t is ignored by the module; b2 vanishes under differentiation.
    del t, b2
    B, two_d = input_.shape
    d = two_d // 2
    assert w1.shape == (d, two_d)
    b1 = jnp.reshape(b1, (d,))
    w2 = jnp.reshape(w2, (d,))

    # ---- wrapper-side weight prep (one-time XLA ops) -------------------------
    # Lane-pad both the hidden dim (dp) and the in/out dim (two_dp) to multiples
    # of 128 so every kernel tensor -- in particular the output store path -- is
    # lane dense.  All padded rows/cols are zero, so they contribute exactly 0.
    dp = 128 * pl.cdiv(d, 128)
    two_dp = 128 * pl.cdiv(two_d, 128)

    w1_p = jnp.pad(w1, ((0, dp - d), (0, two_dp - two_d)))            # (dp, 2dp)
    b1_p = jnp.pad(b1.reshape(1, d), ((0, 0), (0, dp - d)))           # (1, dp)
    b1_p = b1_p.astype(jnp.float32)
    w2_p = jnp.pad(w2, (0, dp - d))                                   # (dp,)

    # sign[j] = -1 for the first d output columns (dv = -dH/dx), +1 afterwards.
    sign = jnp.concatenate([-jnp.ones((d,), w1.dtype),
                            jnp.ones((two_dp - d,), w1.dtype)])

    mm_dtype = jnp.bfloat16 if use_bf16_matmul else input_.dtype
    w1t = jnp.transpose(w1_p).astype(mm_dtype)                        # (2dp, dp)
    w1sw = (w1_p * w2_p[:, None] * sign[None, :]).astype(mm_dtype)    # (dp, 2dp)

    itemsize = np.dtype(mm_dtype).itemsize
    out_itemsize = np.dtype(input_.dtype).itemsize

    # ---- batch tiling ---------------------------------------------------------
    # Aim for ~8 grid steps (lets BlockSpec double-buffering actually overlap the
    # z/out DMA with compute and gives the "parallel" axis work for both v7x
    # TensorCores) while keeping each tile >= 128 rows so the ~0.35us per-step
    # overhead stays amortized.  Row count aligned for full sublane packing.
    row_align = max(8, 32 // itemsize, 32 // out_itemsize)
    target_steps = 8
    min_rows = 128
    tm = max(pl.cdiv(B, target_steps), min_rows)
    tm = min(tm, block_rows)
    tm = _round_up(tm, row_align)
    tm = min(tm, _round_up(B, row_align))      # never exceed the padded batch
    b_pad = _round_up(B, tm)
    grid = (b_pad // tm,)

    z = input_.astype(mm_dtype)
    if b_pad != B or two_dp != two_d:
        z = jnp.pad(z, ((0, b_pad - B), (0, two_dp - two_d)))

    # ---- VMEM budget + scheduling hint ----------------------------------------
    weight_bytes = (w1t.size + w1sw.size) * itemsize + b1_p.size * 4
    needed = (2 * tm * two_dp * itemsize        # z tile, double-buffered
              + 2 * tm * two_dp * out_itemsize  # out tile, double-buffered
              + weight_bytes                    # weights, single-buffered
              + 3 * tm * dp * 4)                # pre / th / s intermediates
    vmem_limit = int(min(64 * 2 ** 20, max(32 * 2 ** 20, 2 * needed)))

    cost = pl.CostEstimate(
        flops=2 * 2 * b_pad * two_dp * dp,                      # two matmuls
        transcendentals=b_pad * dp,                             # tanh
        bytes_accessed=(b_pad * two_dp * (itemsize + out_itemsize)
                        + weight_bytes))

    out = pl.pallas_call(
        hamilton_kernel,
        out_shape=jax.ShapeDtypeStruct((b_pad, two_dp), input_.dtype),
        grid=grid,
        in_specs=[
            pl.BlockSpec((tm, two_dp), lambda i: (i, 0)),       # z tile (pipelined)
            _resident_spec((two_dp, dp)),                       # W1^T
            _resident_spec((dp, two_dp)),                       # W1 * w2 * sign
            _resident_spec((1, dp)),                            # b1
        ],
        out_specs=pl.BlockSpec((tm, two_dp), lambda i: (i, 0)),
        compiler_params=pltpu.CompilerParams(
            dimension_semantics=("parallel",),
            vmem_limit_bytes=vmem_limit),
        cost_estimate=cost,
    )(z, w1t, w1sw, b1_p)

    # TODO(synk): if this is called repeatedly inside an ODE integrator with the
    # same weights, a cross-call weight prefetch (P10) would avoid re-DMA of
    # W1^T / W1sw each solver step (negligible at small dim).
    return out[:B, :two_d]


def _reference(input_, w1, b1, w2):
    # Pure-JAX reference of the same analytic jacobian.
    pre = input_ @ w1.T + b1
    s = (1.0 - jnp.tanh(pre) ** 2) * w2.reshape(1, -1)
    grad = s @ w1
    d = w1.shape[0]
    return jnp.concatenate([-grad[:, :d], grad[:, d:]], axis=-1)


if __name__ == "__main__":
    key = jax.random.PRNGKey(0)
    # Two small configs; the second has dim not a multiple of 64, exercising the
    # lane-padding of both the hidden dim and the 2*dim in/out dim.
    for dim, B in ((64, 8), (48, 40)):
        key, k_z, k_w1, k_b1, k_w2, k_b2 = jax.random.split(key, 6)
        lim1 = 1.0 / np.sqrt(2 * dim)
        lim2 = 1.0 / np.sqrt(dim)
        w1 = jax.random.uniform(k_w1, (dim, 2 * dim), jnp.float32, -lim1, lim1)
        b1 = jax.random.uniform(k_b1, (dim,), jnp.float32, -lim1, lim1)
        w2 = jax.random.uniform(k_w2, (1, dim), jnp.float32, -lim2, lim2)
        b2 = jax.random.uniform(k_b2, (1,), jnp.float32, -lim2, lim2)
        z = jax.random.normal(k_z, (B, 2 * dim), jnp.float32)
        t = jnp.float32(0.0)

        out = jax.block_until_ready(hamilton_forward(t, z, w1, b1, w2, b2))
        ref = _reference(z, w1, b1, w2)
        np.testing.assert_allclose(np.asarray(out), np.asarray(ref),
                                   rtol=1e-5, atol=1e-5)

    print("KERNEL_OK")
</pallas_src>

<mosaic_0001>
module attributes {stable_mosaic.version = 11 : i64} {
  func.func @hamilton_kernel(%arg0: i32, %arg1: memref<8x128xf32, #tpu.memory_space<vmem>>, %arg2: memref<128x128xf32, #tpu.memory_space<vmem>>, %arg3: memref<128x128xf32, #tpu.memory_space<vmem>>, %arg4: memref<1x128xf32, #tpu.memory_space<vmem>>, %arg5: memref<8x128xf32, #tpu.memory_space<vmem>>) attributes {dimension_semantics = [#tpu.dimension_semantics<parallel>], iteration_bounds = array<i64: 1>, scalar_prefetch = 0 : i64, scratch_operands = 0 : i64, tpu.core_type = #tpu.core_type<tc>, window_params = [{transform_indices = @transform_0, window_bounds = array<i64: 8, 128>}, {pipeline_mode = #tpu.pipeline_mode<synchronous>, transform_indices = @transform_1, window_bounds = array<i64: 128, 128>}, {pipeline_mode = #tpu.pipeline_mode<synchronous>, transform_indices = @transform_2, window_bounds = array<i64: 128, 128>}, {pipeline_mode = #tpu.pipeline_mode<synchronous>, transform_indices = @transform_3, window_bounds = array<i64: 1, 128>}, {transform_indices = @transform_4, window_bounds = array<i64: 8, 128>}]} {
    %c0 = arith.constant 0 : index
    %c0_0 = arith.constant 0 : index
    %0 = vector.load %arg1[%c0, %c0_0] : memref<8x128xf32, #tpu.memory_space<vmem>>, vector<8x128xf32>
    %c0_1 = arith.constant 0 : index
    %c0_2 = arith.constant 0 : index
    %1 = vector.load %arg2[%c0_1, %c0_2] : memref<128x128xf32, #tpu.memory_space<vmem>>, vector<128x128xf32>
    %cst = arith.constant dense<0.000000e+00> : vector<8x128xf32>
    %2 = tpu.matmul %0, %1, %cst {dimension_numbers = #tpu.dot_dimension_numbers<[1], [0], [0], [1], [0, 0, 1, 1], [], []>} : vector<8x128xf32>, vector<128x128xf32>, vector<8x128xf32> -> vector<8x128xf32>
    %c0_3 = arith.constant 0 : index
    %c0_4 = arith.constant 0 : index
    %3 = vector.load %arg4[%c0_3, %c0_4] : memref<1x128xf32, #tpu.memory_space<vmem>>, vector<1x128xf32>
    %4 = vector.broadcast %3 : vector<1x128xf32> to vector<8x128xf32>
    %5 = arith.addf %2, %4 : vector<8x128xf32>
    %6 = math.tanh %5 : vector<8x128xf32>
    %7 = arith.mulf %6, %6 : vector<8x128xf32>
    %cst_5 = arith.constant 1.000000e+00 : f32
    %8 = vector.broadcast %cst_5 : f32 to vector<8x128xf32>
    %9 = arith.subf %8, %7 : vector<8x128xf32>
    %c0_6 = arith.constant 0 : index
    %c0_7 = arith.constant 0 : index
    %10 = vector.load %arg3[%c0_6, %c0_7] : memref<128x128xf32, #tpu.memory_space<vmem>>, vector<128x128xf32>
    %cst_8 = arith.constant dense<0.000000e+00> : vector<8x128xf32>
    %11 = tpu.matmul %9, %10, %cst_8 {dimension_numbers = #tpu.dot_dimension_numbers<[1], [0], [0], [1], [0, 0, 1, 1], [], []>} : vector<8x128xf32>, vector<128x128xf32>, vector<8x128xf32> -> vector<8x128xf32>
    %c0_9 = arith.constant 0 : index
    %c0_10 = arith.constant 0 : index
    %12 = vector.load %arg5[%c0_9, %c0_10] : memref<8x128xf32, #tpu.memory_space<vmem>>, vector<8x128xf32>
    tpu.vector_store %arg5[%c0_9, %c0_10], %11 {strides = array<i32>} : memref<8x128xf32, #tpu.memory_space<vmem>>, vector<8x128xf32>,
    return
  }
  func.func @transform_0(%arg0: i32) -> (i32, i32) {
    %c0_i32 = arith.constant 0 : i32
    %c0_i32_0 = arith.constant 0 : i32
    return %arg0, %c0_i32 : i32, i32
  }
  func.func @transform_1(%arg0: i32) -> (i32, i32) {
    %c0_i32 = arith.constant 0 : i32
    %c0_i32_0 = arith.constant 0 : i32
    %c0_i32_1 = arith.constant 0 : i32
    return %c0_i32, %c0_i32_0 : i32, i32
  }
  func.func @transform_2(%arg0: i32) -> (i32, i32) {
    %c0_i32 = arith.constant 0 : i32
    %c0_i32_0 = arith.constant 0 : i32
    %c0_i32_1 = arith.constant 0 : i32
    return %c0_i32, %c0_i32_0 : i32, i32
  }
  func.func @transform_3(%arg0: i32) -> (i32, i32) {
    %c0_i32 = arith.constant 0 : i32
    %c0_i32_0 = arith.constant 0 : i32
    %c0_i32_1 = arith.constant 0 : i32
    return %c0_i32, %c0_i32_0 : i32, i32
  }
  func.func @transform_4(%arg0: i32) -> (i32, i32) {
    %c0_i32 = arith.constant 0 : i32
    %c0_i32_0 = arith.constant 0 : i32
    return %arg0, %c0_i32 : i32, i32
  }
}

</mosaic_0001>

<llo_original>
// kernel: tpu_custom_call.1
$region0: #{tpu_custom_call.1}
  #allocation0 [shape = 'u32[]', space=smem, size = 0x4, offset = 0x4, fixed_abs, tag = 'smem constant byte address 0x4 - core index']
  #allocation1 [shape = 'u32[144,128]{1,0:T(1,128)}', space=vmem, size = 0x12000, scoped, tag = 'internal scratch']
  %s0 = inlined_call_operand.hbm [shape: f32[8,128], index: 0, kind: input, shape index: {}]
  %s1 = inlined_call_operand.hbm [shape: f32[128,128], index: 1, kind: input, shape index: {}]
  %s2 = inlined_call_operand.hbm [shape: f32[128,128], index: 2, kind: input, shape index: {}]
  %s3 = inlined_call_operand.vmem [shape: f32[1,128], index: 3, kind: input, shape index: {}]
  %s4 = inlined_call_operand.hbm [shape: f32[8,128], index: 4, kind: output, shape index: {}]
  %s5 = sld [smem:[#allocation0]]
  $region38: #{tpu_custom_call.1} parent=0
    _
  %s7 = ssub.s32 1, %s5
  %s8 = scalar_select 0, %s7, %s5
  $region1: #{tpu_custom_call.1} parent=0
    #allocation2 [shape = 'u8[4096]{0}', space=vmem, size = 0x1000, scoped, tag = 'input window, operand 0, single buffered']
    #allocation3 [shape = 's32[1]{0}', space=sflag, size = 0x4, scoped, tag = 'scoped memory for tpu_custom_call.1']
    #allocation4 [shape = 's32[1]{0}', space=sflag, size = 0x4, scoped, tag = 'scoped memory for tpu_custom_call.1']
    #allocation5 [shape = 'u8[65536]{0}', space=vmem, size = 0x10000, scoped, tag = 'input window, operand 1, single buffered']
    #allocation6 [shape = 's32[1]{0}', space=sflag, size = 0x4, scoped, tag = 'scoped memory for tpu_custom_call.1']
    #allocation7 [shape = 'u8[65536]{0}', space=vmem, size = 0x10000, scoped, tag = 'input window, operand 2, single buffered']
    #allocation8 [shape = 'u8[4096]{0}', space=vmem, size = 0x1000, scoped, tag = 'output window, operand 0, single buffered']
    %9 = vsyncpa [#allocation3], 0
    %10 = vsyncpa [#allocation6], 0
    %11 = vsyncpa [#allocation4], 0
    // Predicated region
    $region2: #{tpu_custom_call.1} parent=1 // pred_check
      _
    $region3: #{tpu_custom_call.1} parent=1 // pred_check_branch
      %13 = sbr.rel (0) target = $region5
    $region4: #{tpu_custom_call.1} parent=1 // pred_region
      %s15 = ssub.s32 128, 128
      %16 = vsyncadd [#allocation3], %s15
      %s18 = sshll.u32 [#allocation2], 4
      %s19 = int_to_ptr.vmem [resolvable:$true] %s18
      %21 = dma.hbm_to_vmem [thread:$0]  %s0, 128, %s19, [#allocation3]
    $region5: #{tpu_custom_call.1} parent=1 // pred_fallthru
      _
    // Predicated region
    $region6: #{tpu_custom_call.1} parent=1 // pred_check
      _
    $region7: #{tpu_custom_call.1} parent=1 // pred_check_branch
      %23 = sbr.rel (0) target = $region9
    $region8: #{tpu_custom_call.1} parent=1 // pred_region
      %s25 = ssub.s32 2048, 2048
      %26 = vsyncadd [#allocation6], %s25
      %s27 = sshll.u32 [#allocation5], 4
      %s28 = int_to_ptr.vmem [resolvable:$true] %s27
      %33 = dma.hbm_to_vmem [thread:$0]  %s1, 2048, %s28, [#allocation6], 128, 128, 8
    $region9: #{tpu_custom_call.1} parent=1 // pred_fallthru
      _
    // Predicated region
    $region10: #{tpu_custom_call.1} parent=1 // pred_check
      _
    $region11: #{tpu_custom_call.1} parent=1 // pred_check_branch
      %35 = sbr.rel (0) target = $region13
    $region12: #{tpu_custom_call.1} parent=1 // pred_region
      %s37 = ssub.s32 2048, 2048
      %38 = vsyncadd [#allocation6], %s37
      %s39 = sshll.u32 [#allocation7], 4
      %s40 = int_to_ptr.vmem [resolvable:$true] %s39
      %45 = dma.hbm_to_vmem [thread:$0]  %s2, 2048, %s40, [#allocation6], 128, 128, 8
    $region13: #{tpu_custom_call.1} parent=1 // pred_fallthru
      _
    // Predicated region
    $region14: #{tpu_custom_call.1} parent=1 // pred_check
      _
    $region15: #{tpu_custom_call.1} parent=1 // pred_check_branch
      %47 = sbr.rel (0) target = $region17
    $region16: #{tpu_custom_call.1} parent=1 // pred_region
      _
    $region17: #{tpu_custom_call.1} parent=1 // pred_fallthru
      _
    // Predicated region
    $region18: #{tpu_custom_call.1} parent=1 // pred_check
      _
    $region19: #{tpu_custom_call.1} parent=1 // pred_check_branch
      %49 = sbr.rel (0) target = $region21
    $region20: #{tpu_custom_call.1} parent=1 // pred_region
      %50 = dma.done [#allocation3], 128
    $region21: #{tpu_custom_call.1} parent=1 // pred_fallthru
      _
    // Predicated region
    $region22: #{tpu_custom_call.1} parent=1 // pred_check
      _
    $region23: #{tpu_custom_call.1} parent=1 // pred_check_branch
      %52 = sbr.rel (0) target = $region25
    $region24: #{tpu_custom_call.1} parent=1 // pred_region
      %53 = dma.done [#allocation6], 2048
    $region25: #{tpu_custom_call.1} parent=1 // pred_fallthru
      _
    // Predicated region
    $region26: #{tpu_custom_call.1} parent=1 // pred_check
      _
    $region27: #{tpu_custom_call.1} parent=1 // pred_check_branch
      %55 = sbr.rel (0) target = $region29
    $region28: #{tpu_custom_call.1} parent=1 // pred_region
      %56 = dma.done [#allocation6], 2048
    $region29: #{tpu_custom_call.1} parent=1 // pred_fallthru
      _
    %v57 = vld [vmem:[#allocation2] sm:$0xff]
    %v58 = vld [vmem:[#allocation5] sm:$0xff]
    %v59 = vld [vmem:[#allocation5 + $0x8] sm:$0xff]
    %v60 = vld [vmem:[#allocation5 + $0x10] sm:$0xff]
    %v61 = vld [vmem:[#allocation5 + $0x18] sm:$0xff]
    %v62 = vld [vmem:[#allocation5 + $0x20] sm:$0xff]
    %v63 = vld [vmem:[#allocation5 + $0x28] sm:$0xff]
    %v64 = vld [vmem:[#allocation5 + $0x30] sm:$0xff]
    %v65 = vld [vmem:[#allocation5 + $0x38] sm:$0xff]
    %v66 = vld [vmem:[#allocation5 + $0x40] sm:$0xff]
    %v67 = vld [vmem:[#allocation5 + $0x48] sm:$0xff]
    %v68 = vld [vmem:[#allocation5 + $0x50] sm:$0xff]
    %v69 = vld [vmem:[#allocation5 + $0x58] sm:$0xff]
    %v70 = vld [vmem:[#allocation5 + $0x60] sm:$0xff]
    %v71 = vld [vmem:[#allocation5 + $0x68] sm:$0xff]
    %v72 = vld [vmem:[#allocation5 + $0x70] sm:$0xff]
    %v73 = vld [vmem:[#allocation5 + $0x78] sm:$0xff]
    %v74 = vld [vmem:[%s3] sm:$0x1]
    %v76 = vlaneseq
    %v77 = vshrl.u32 %v76, 7
    %v78 = vsub.s32 0, %v77
    %v79 = vrot.slane %v74, %v78
    %81 = vmatprep.subr.mxu0 0.0
    %82 = vmatpush1.msra.mxu0 %v58
    %83 = vmatprep.subr.mxu0 0.0
    %84 = vmatpush1.msra.mxu0 %v59
    %85 = vmatprep.subr.mxu0 0.0
    %86 = vmatpush1.msra.mxu0 %v60
    %87 = vmatprep.subr.mxu0 0.0
    %88 = vmatpush1.msra.mxu0 %v61
    %89 = vmatprep.subr.mxu0 0.0
    %90 = vmatpush1.msra.mxu0 %v62
    %91 = vmatprep.subr.mxu0 0.0
    %92 = vmatpush1.msra.mxu0 %v63
    %93 = vmatprep.subr.mxu0 0.0
    %94 = vmatpush1.msra.mxu0 %v64
    %95 = vmatprep.subr.mxu0 0.0
    %96 = vmatpush1.msra.mxu0 %v65
    %97 = vmatprep.subr.mxu0 0.0
    %98 = vmatpush1.msra.mxu0 %v66
    %99 = vmatprep.subr.mxu0 0.0
    %100 = vmatpush1.msra.mxu0 %v67
    %101 = vmatprep.subr.mxu0 0.0
    %102 = vmatpush1.msra.mxu0 %v68
    %103 = vmatprep.subr.mxu0 0.0
    %104 = vmatpush1.msra.mxu0 %v69
    %105 = vmatprep.subr.mxu0 0.0
    %106 = vmatpush1.msra.mxu0 %v70
    %107 = vmatprep.subr.mxu0 0.0
    %108 = vmatpush1.msra.mxu0 %v71
    %109 = vmatprep.subr.mxu0 0.0
    %110 = vmatpush1.msra.mxu0 %v72
    %111 = vmatprep.subr.mxu0 0.0
    %112 = vmatpush1.msra.mxu0 %v73
    %113 = vmatprep.subr.mxu0 0.0
    %114 = vmatpush1.msra.mxu0 0.0
    %115 = vmatprep.subr.mxu0 0.0
    %116 = vmatpush1.msra.mxu0 0.0
    %117 = vmatprep.subr.mxu0 0.0
    %118 = vmatpush1.msra.mxu0 0.0
    %119 = vmatprep.subr.mxu0 0.0
    %120 = vmatpush1.msra.mxu0 0.0
    %121 = vmatprep.subr.mxu0 0.0
    %122 = vmatpush1.msra.mxu0 0.0
    %123 = vmatprep.subr.mxu0 0.0
    %124 = vmatpush1.msra.mxu0 0.0
    %125 = vmatprep.subr.mxu0 0.0
    %126 = vmatpush1.msra.mxu0 0.0
    %127 = vmatprep.subr.mxu0 0.0
    %128 = vmatpush1.msra.mxu0 0.0
    %129 = vmatprep.subr.mxu0 0.0
    %130 = vmatpush1.msra.mxu0 0.0
    %131 = vmatprep.subr.mxu0 0.0
    %132 = vmatpush1.msra.mxu0 0.0
    %133 = vmatprep.subr.mxu0 0.0
    %134 = vmatpush1.msra.mxu0 0.0
    %135 = vmatprep.subr.mxu0 0.0
    %136 = vmatpush1.msra.mxu0 0.0
    %137 = vmatprep.subr.mxu0 0.0
    %138 = vmatpush1.msra.mxu0 0.0
    %139 = vmatprep.subr.mxu0 0.0
    %140 = vmatpush1.msra.mxu0 0.0
    %141 = vmatprep.subr.mxu0 0.0
    %142 = vmatpush1.msra.mxu0 0.0
    %143 = vmatprep.subr.mxu0 0.0
    %144 = vmatpush1.msra.mxu0 0.0
    %145 = vmatprep.mubr.f32.mxu0 0.0
    %146 = vmatmul.mubr.f32.gmra.mrb[0].mxu0 %v57
    %v147 = vpop.f32.mrb[0].mxu0
    %v148 = vadd.f32 %v79, %v147
    %v149 = vpop.f32.mrb[0].mxu0
    %150 = vdwg.mxu0
    %v151 = vtanh.pop %v148
    %v152 = vmul.f32 %v151, %v151
    %v153 = vsub.f32 1.0, %v152
    %v154 = vld [vmem:[#allocation7] sm:$0xff]
    %v155 = vld [vmem:[#allocation7 + $0x8] sm:$0xff]
    %v156 = vld [vmem:[#allocation7 + $0x10] sm:$0xff]
    %v157 = vld [vmem:[#allocation7 + $0x18] sm:$0xff]
    %v158 = vld [vmem:[#allocation7 + $0x20] sm:$0xff]
    %v159 = vld [vmem:[#allocation7 + $0x28] sm:$0xff]
    %v160 = vld [vmem:[#allocation7 + $0x30] sm:$0xff]
    %v161 = vld [vmem:[#allocation7 + $0x38] sm:$0xff]
    %v162 = vld [vmem:[#allocation7 + $0x40] sm:$0xff]
    %v163 = vld [vmem:[#allocation7 + $0x48] sm:$0xff]
    %v164 = vld [vmem:[#allocation7 + $0x50] sm:$0xff]
    %v165 = vld [vmem:[#allocation7 + $0x58] sm:$0xff]
    %v166 = vld [vmem:[#allocation7 + $0x60] sm:$0xff]
    %v167 = vld [vmem:[#allocation7 + $0x68] sm:$0xff]
    %v168 = vld [vmem:[#allocation7 + $0x70] sm:$0xff]
    %v169 = vld [vmem:[#allocation7 + $0x78] sm:$0xff]
    %170 = vmatprep.subr.mxu0 0.0
    %171 = vmatpush1.msra.mxu0 %v154
    %172 = vmatprep.subr.mxu0 0.0
    %173 = vmatpush1.msra.mxu0 %v155
    %174 = vmatprep.subr.mxu0 0.0
    %175 = vmatpush1.msra.mxu0 %v156
    %176 = vmatprep.subr.mxu0 0.0
    %177 = vmatpush1.msra.mxu0 %v157
    %178 = vmatprep.subr.mxu0 0.0
    %179 = vmatpush1.msra.mxu0 %v158
    %180 = vmatprep.subr.mxu0 0.0
    %181 = vmatpush1.msra.mxu0 %v159
    %182 = vmatprep.subr.mxu0 0.0
    %183 = vmatpush1.msra.mxu0 %v160
    %184 = vmatprep.subr.mxu0 0.0
    %185 = vmatpush1.msra.mxu0 %v161
    %186 = vmatprep.subr.mxu0 0.0
    %187 = vmatpush1.msra.mxu0 %v162
    %188 = vmatprep.subr.mxu0 0.0
    %189 = vmatpush1.msra.mxu0 %v163
    %190 = vmatprep.subr.mxu0 0.0
    %191 = vmatpush1.msra.mxu0 %v164
    %192 = vmatprep.subr.mxu0 0.0
    %193 = vmatpush1.msra.mxu0 %v165
    %194 = vmatprep.subr.mxu0 0.0
    %195 = vmatpush1.msra.mxu0 %v166
    %196 = vmatprep.subr.mxu0 0.0
    %197 = vmatpush1.msra.mxu0 %v167
    %198 = vmatprep.subr.mxu0 0.0
    %199 = vmatpush1.msra.mxu0 %v168
    %200 = vmatprep.subr.mxu0 0.0
    %201 = vmatpush1.msra.mxu0 %v169
    %202 = vmatprep.subr.mxu0 0.0
    %203 = vmatpush1.msra.mxu0 0.0
    %204 = vmatprep.subr.mxu0 0.0
    %205 = vmatpush1.msra.mxu0 0.0
    %206 = vmatprep.subr.mxu0 0.0
    %207 = vmatpush1.msra.mxu0 0.0
    %208 = vmatprep.subr.mxu0 0.0
    %209 = vmatpush1.msra.mxu0 0.0
    %210 = vmatprep.subr.mxu0 0.0
    %211 = vmatpush1.msra.mxu0 0.0
    %212 = vmatprep.subr.mxu0 0.0
    %213 = vmatpush1.msra.mxu0 0.0
    %214 = vmatprep.subr.mxu0 0.0
    %215 = vmatpush1.msra.mxu0 0.0
    %216 = vmatprep.subr.mxu0 0.0
    %217 = vmatpush1.msra.mxu0 0.0
    %218 = vmatprep.subr.mxu0 0.0
    %219 = vmatpush1.msra.mxu0 0.0
    %220 = vmatprep.subr.mxu0 0.0
    %221 = vmatpush1.msra.mxu0 0.0
    %222 = vmatprep.subr.mxu0 0.0
    %223 = vmatpush1.msra.mxu0 0.0
    %224 = vmatprep.subr.mxu0 0.0
    %225 = vmatpush1.msra.mxu0 0.0
    %226 = vmatprep.subr.mxu0 0.0
    %227 = vmatpush1.msra.mxu0 0.0
    %228 = vmatprep.subr.mxu0 0.0
    %229 = vmatpush1.msra.mxu0 0.0
    %230 = vmatprep.subr.mxu0 0.0
    %231 = vmatpush1.msra.mxu0 0.0
    %232 = vmatprep.subr.mxu0 0.0
    %233 = vmatpush1.msra.mxu0 0.0
    %234 = vmatprep.mubr.f32.mxu0 0.0
    %235 = vmatmul.mubr.f32.gmra.mrb[0].mxu0 %v153
    %v236 = vpop.f32.mrb[0].mxu0
    %v237 = vadd.f32 0.0, %v236
    %v238 = vpop.f32.mrb[0].mxu0
    %239 = vdwg.mxu0
    %240 = vst [vmem:[#allocation8] sm:$0xff] %v237
    // Predicated region
    $region30: #{tpu_custom_call.1} parent=1 // pred_check
      _
    $region31: #{tpu_custom_call.1} parent=1 // pred_check_branch
      %242 = sbr.rel (0) target = $region33
    $region32: #{tpu_custom_call.1} parent=1 // pred_region
      %s244 = ssub.s32 128, 128
      %245 = vsyncadd [#allocation4], %s244
      %s247 = sshll.u32 [#allocation8], 4
      %s248 = int_to_ptr.vmem [resolvable:$true] %s247
      %250 = dma.vmem_to_hbm [thread:$0]  %s248, 128, %s4, [#allocation4]
    $region33: #{tpu_custom_call.1} parent=1 // pred_fallthru
      _
    // Predicated region
    $region34: #{tpu_custom_call.1} parent=1 // pred_check
      _
    $region35: #{tpu_custom_call.1} parent=1 // pred_check_branch
      %252 = sbr.rel (0) target = $region37
    $region36: #{tpu_custom_call.1} parent=1 // pred_region
      %253 = dma.done [#allocation4], 128
    $region37: #{tpu_custom_call.1} parent=1 // pred_fallthru
      _
    %254 = vsyncpa [#allocation3], 1
    %255 = vsyncpa [#allocation6], 1
    %256 = vsyncpa [#allocation4], 1

</llo_original>
